<compile_context>
chip_gen: v7x
topology: tpu7x:2x2x1
jax: 0.10.0
libtpu: 0.0.40
codegen_flags: <defaults>
</compile_context>

<pallas_src>
import functools

import jax
import jax.numpy as jnp
from jax.experimental import pallas as pl
from jax.experimental.pallas import tpu as pltpu

EPS = 1e-5
LANE = 128
SUBLANE = 8


def _ceil_to(n, m):
    return ((n + m - 1) // m) * m


# ----------------------------------------------------------------------------- kernel


def _bn_relu(h, gamma, beta, inv_b):
    """Training-mode BatchNorm1d (biased variance, eps=1e-5) + ReLU.

    `h` is [Bp, F] with any padded batch rows exactly zero, so sums over all Bp
    rows equal sums over the true batch; `inv_b` is 1/B for the *true* batch.
    Stats live on cheap [1, F] rows; only 2 [Bp, F] ops apply them.
    """
    s = jnp.sum(h, axis=0, keepdims=True)            # [1, F]
    ss = jnp.sum(h * h, axis=0, keepdims=True)       # [1, F]
    mu = s * inv_b
    var = ss * inv_b - mu * mu                       # biased variance
    scale = gamma * jax.lax.rsqrt(var + EPS)         # [1, F]  (rsqrt -> EUP)
    shift = beta - mu * scale                        # [1, F]
    return jnp.maximum(h * scale + shift, 0.0)       # 2 VPU ops on [Bp, F] + max


def encoder_decoder_kernel(
    x_ref, w1_ref, w2_ref, w3_ref, w4_ref, vec_ref, o_ref,
    *, b_true, f1, f2, f3, f4,
):
    inv_b = jnp.float32(1.0 / b_true)
    b_pad = x_ref.shape[0]

    # Row mask (trace-time branch): keeps padded batch rows identically zero so
    # the next layer's batch statistics stay exact.  No-op when B % 8 == 0.
    if b_pad != b_true:
        row_ids = jax.lax.broadcasted_iota(jnp.int32, (b_pad, 1), 0)
        row_mask = (row_ids < b_true).astype(jnp.float32)
    else:
        row_mask = None

    def mask_rows(h):
        return h if row_mask is None else h * row_mask

    # Packed per-feature vectors (read once, [1, F] each):
    #   rows 0..6 = gamma1, beta1, gamma2, beta2, gamma3, beta3, b4
    g1 = vec_ref[0:1, :f1]
    be1 = vec_ref[1:2, :f1]
    g2 = vec_ref[2:3, :f2]
    be2 = vec_ref[3:4, :f2]
    g3 = vec_ref[4:5, :f3]
    be3 = vec_ref[5:6, :f3]
    b4 = vec_ref[6:7, :f4]

    x = x_ref[...]

    # ---- encoder ----
    # Linear(input_dim, hidden) [bias dropped: cancelled by BN mean] + BN + ReLU
    h = jnp.dot(x, w1_ref[...], preferred_element_type=jnp.float32)
    h = mask_rows(_bn_relu(h, g1, be1, inv_b))

    # Linear(hidden, hidden//2) + BN + ReLU
    h = jnp.dot(h, w2_ref[...], preferred_element_type=jnp.float32)
    h = mask_rows(_bn_relu(h, g2, be2, inv_b))

    # ---- decoder ----
    # Linear(hidden//2, hidden) + BN + ReLU
    h = jnp.dot(h, w3_ref[...], preferred_element_type=jnp.float32)
    h = mask_rows(_bn_relu(h, g3, be3, inv_b))

    # Linear(hidden, output_dim) -- bias kept (no BN after it).
    o_ref[...] = jnp.dot(h, w4_ref[...], preferred_element_type=jnp.float32) + b4


# ----------------------------------------------------------------------------- wrapper


def encoder_decoder(x, params):
    """Runs the fused EncoderDecoder forward pass.  `params` are unpadded
    PyTorch-shaped arrays [w1,b1,g1,be1, w2,b2,g2,be2, w3,b3,g3,be3, w4,b4]."""
    (w1, _b1, g1, be1, w2, _b2, g2, be2, w3, _b3, g3, be3, w4, b4) = params
    B, din = x.shape
    hidden = w1.shape[1]
    half = w2.shape[1]
    dout = w4.shape[1]

    # Padded (lane-dense) shapes.
    dp = _ceil_to(din, LANE)
    hp = _ceil_to(hidden, LANE)
    hfp = _ceil_to(half, LANE)
    op = _ceil_to(dout, LANE)
    bp = _ceil_to(B, SUBLANE)
    fmax = max(hp, hfp, op)

    def pad2(a, r, c):
        return jnp.pad(a, ((0, r - a.shape[0]), (0, c - a.shape[1])))

    xp = pad2(x, bp, dp)
    w1p = pad2(w1, dp, hp)
    w2p = pad2(w2, hp, hfp)
    w3p = pad2(w3, hfp, hp)
    w4p = pad2(w4, hp, op)

    def row(v):
        v = v.reshape(1, -1)
        return jnp.pad(v, ((0, 0), (0, fmax - v.shape[1])))

    # Pack the 7 per-feature vectors into one [8, fmax] input (8 rows for sublane
    # alignment); padded tails are zero so padded feature columns stay zero.
    vec = jnp.concatenate(
        [row(g1), row(be1), row(g2), row(be2), row(g3), row(be3), row(b4),
         jnp.zeros((1, fmax), jnp.float32)],
        axis=0,
    )

    flops = 2 * bp * (dp * hp + hp * hfp + hfp * hp + hp * op)
    transcendentals = hp + hfp + hp  # 3 per-feature rsqrt rows
    bytes_accessed = 4 * (
        xp.size + w1p.size + w2p.size + w3p.size + w4p.size + vec.size + bp * op
    )

    kernel = functools.partial(
        encoder_decoder_kernel, b_true=B, f1=hp, f2=hfp, f3=hp, f4=op
    )
    vmem_spec = pl.BlockSpec(memory_space=pltpu.MemorySpace.VMEM)

    out_padded = pl.pallas_call(
        kernel,
        out_shape=jax.ShapeDtypeStruct((bp, op), jnp.float32),
        in_specs=[vmem_spec] * 6,
        out_specs=vmem_spec,
        cost_estimate=pl.CostEstimate(
            flops=flops,
            transcendentals=transcendentals,
            bytes_accessed=bytes_accessed,
        ),
    )(xp, w1p, w2p, w3p, w4p, vec)

    return out_padded[:B, :dout]


# ----------------------------------------------------------------------------- params / reference


def make_params(key, input_dim, hidden_dim, output_dim):
    """Deterministic synthetic parameters with PyTorch-module shapes."""
    dims = [
        (input_dim, hidden_dim),        # encoder Linear 1
        (hidden_dim, hidden_dim // 2),  # encoder Linear 2
        (hidden_dim // 2, hidden_dim),  # decoder Linear 1
        (hidden_dim, output_dim),       # decoder Linear 2
    ]
    bn_dims = [hidden_dim, hidden_dim // 2, hidden_dim]
    keys = jax.random.split(key, 8)
    params = []
    for i, (din, dout) in enumerate(dims):
        bound = 1.0 / float(din) ** 0.5
        w = jax.random.uniform(keys[2 * i], (din, dout), jnp.float32, -bound, bound)
        b = jax.random.uniform(keys[2 * i + 1], (dout,), jnp.float32, -bound, bound)
        params += [w, b]
        if i < 3:  # BatchNorm1d affine init: gamma=1, beta=0
            params += [jnp.ones((bn_dims[i],), jnp.float32),
                       jnp.zeros((bn_dims[i],), jnp.float32)]
    return params  # [w1,b1,g1,be1, w2,b2,g2,be2, w3,b3,g3,be3, w4,b4]


def reference(x, params):
    """Pure-JAX reference (keeps the pre-BN biases to validate their exact cancellation)."""
    w1, b1, g1, be1, w2, b2, g2, be2, w3, b3, g3, be3, w4, b4 = params

    def bn_relu(h, g, be):
        mu = jnp.mean(h, axis=0, keepdims=True)
        var = jnp.mean((h - mu) ** 2, axis=0, keepdims=True)  # biased variance
        return jnp.maximum((h - mu) * jax.lax.rsqrt(var + EPS) * g + be, 0.0)

    h = bn_relu(x @ w1 + b1, g1, be1)
    h = bn_relu(h @ w2 + b2, g2, be2)
    h = bn_relu(h @ w3 + b3, g3, be3)
    return h @ w4 + b4


# ----------------------------------------------------------------------------- demo


if __name__ == "__main__":
    B, input_dim, hidden_dim, output_dim = 8, 16, 32, 8

    key = jax.random.PRNGKey(0)
    kx, kp = jax.random.split(key)
    x = jax.random.normal(kx, (B, input_dim), jnp.float32)
    params = make_params(kp, input_dim, hidden_dim, output_dim)

    out = encoder_decoder(x, params)
    out = jax.block_until_ready(out)

    ref = reference(x, params)
    assert out.shape == (B, output_dim)
    assert jnp.allclose(out, ref, atol=1e-4, rtol=1e-4), (
        f"mismatch: max abs err {jnp.max(jnp.abs(out - ref))}"
    )
    print("KERNEL_OK")
</pallas_src>

<mosaic_0001>
module attributes {stable_mosaic.version = 11 : i64} {
  func.func @encoder_decoder_kernel(%arg0: memref<8x128xf32, #tpu.memory_space<vmem>>, %arg1: memref<128x128xf32, #tpu.memory_space<vmem>>, %arg2: memref<128x128xf32, #tpu.memory_space<vmem>>, %arg3: memref<128x128xf32, #tpu.memory_space<vmem>>, %arg4: memref<128x128xf32, #tpu.memory_space<vmem>>, %arg5: memref<8x128xf32, #tpu.memory_space<vmem>>, %arg6: memref<8x128xf32, #tpu.memory_space<vmem>>) attributes {dimension_semantics = [], scalar_prefetch = 0 : i64, scratch_operands = 0 : i64, tpu.core_type = #tpu.core_type<tc>} {
    %c0 = arith.constant 0 : index
    %c0_0 = arith.constant 0 : index
    %0 = vector.load %arg5[%c0, %c0_0] : memref<8x128xf32, #tpu.memory_space<vmem>>, vector<1x128xf32>
    %c1 = arith.constant 1 : index
    %c0_1 = arith.constant 0 : index
    %1 = vector.load %arg5[%c1, %c0_1] : memref<8x128xf32, #tpu.memory_space<vmem>>, vector<1x128xf32>
    %c2 = arith.constant 2 : index
    %c0_2 = arith.constant 0 : index
    %2 = vector.load %arg5[%c2, %c0_2] : memref<8x128xf32, #tpu.memory_space<vmem>>, vector<1x128xf32>
    %c3 = arith.constant 3 : index
    %c0_3 = arith.constant 0 : index
    %3 = vector.load %arg5[%c3, %c0_3] : memref<8x128xf32, #tpu.memory_space<vmem>>, vector<1x128xf32>
    %c4 = arith.constant 4 : index
    %c0_4 = arith.constant 0 : index
    %4 = vector.load %arg5[%c4, %c0_4] : memref<8x128xf32, #tpu.memory_space<vmem>>, vector<1x128xf32>
    %c5 = arith.constant 5 : index
    %c0_5 = arith.constant 0 : index
    %5 = vector.load %arg5[%c5, %c0_5] : memref<8x128xf32, #tpu.memory_space<vmem>>, vector<1x128xf32>
    %c6 = arith.constant 6 : index
    %c0_6 = arith.constant 0 : index
    %6 = vector.load %arg5[%c6, %c0_6] : memref<8x128xf32, #tpu.memory_space<vmem>>, vector<1x128xf32>
    %c0_7 = arith.constant 0 : index
    %c0_8 = arith.constant 0 : index
    %7 = vector.load %arg0[%c0_7, %c0_8] : memref<8x128xf32, #tpu.memory_space<vmem>>, vector<8x128xf32>
    %c0_9 = arith.constant 0 : index
    %c0_10 = arith.constant 0 : index
    %8 = vector.load %arg1[%c0_9, %c0_10] : memref<128x128xf32, #tpu.memory_space<vmem>>, vector<128x128xf32>
    %cst = arith.constant dense<0.000000e+00> : vector<8x128xf32>
    %9 = tpu.matmul %7, %8, %cst {dimension_numbers = #tpu.dot_dimension_numbers<[1], [0], [0], [1], [0, 0, 1, 1], [], []>} : vector<8x128xf32>, vector<128x128xf32>, vector<8x128xf32> -> vector<8x128xf32>
    %cst_11 = arith.constant dense<0.000000e+00> : vector<128xf32>
    %10 = vector.multi_reduction <add>, %9, %cst_11 [0] : vector<8x128xf32> to vector<128xf32>
    %11 = vector.shape_cast %10 : vector<128xf32> to vector<1x128xf32>
    %12 = arith.mulf %9, %9 : vector<8x128xf32>
    %cst_12 = arith.constant dense<0.000000e+00> : vector<128xf32>
    %13 = vector.multi_reduction <add>, %12, %cst_12 [0] : vector<8x128xf32> to vector<128xf32>
    %14 = vector.shape_cast %13 : vector<128xf32> to vector<1x128xf32>
    %cst_13 = arith.constant 1.250000e-01 : f32
    %15 = vector.broadcast %cst_13 : f32 to vector<1x128xf32>
    %16 = arith.mulf %11, %15 : vector<1x128xf32>
    %cst_14 = arith.constant 1.250000e-01 : f32
    %17 = vector.broadcast %cst_14 : f32 to vector<1x128xf32>
    %18 = arith.mulf %14, %17 : vector<1x128xf32>
    %19 = arith.mulf %16, %16 : vector<1x128xf32>
    %20 = arith.subf %18, %19 : vector<1x128xf32>
    %cst_15 = arith.constant 9.99999974E-6 : f32
    %21 = vector.broadcast %cst_15 : f32 to vector<1x128xf32>
    %22 = arith.addf %20, %21 : vector<1x128xf32>
    %23 = math.rsqrt %22 : vector<1x128xf32>
    %24 = arith.mulf %0, %23 : vector<1x128xf32>
    %25 = arith.mulf %16, %24 : vector<1x128xf32>
    %26 = arith.subf %1, %25 : vector<1x128xf32>
    %27 = vector.broadcast %24 : vector<1x128xf32> to vector<8x128xf32>
    %28 = arith.mulf %9, %27 : vector<8x128xf32>
    %29 = vector.broadcast %26 : vector<1x128xf32> to vector<8x128xf32>
    %30 = arith.addf %28, %29 : vector<8x128xf32>
    %cst_16 = arith.constant 0.000000e+00 : f32
    %31 = vector.broadcast %cst_16 : f32 to vector<8x128xf32>
    %32 = arith.maximumf %30, %31 : vector<8x128xf32>
    %c0_17 = arith.constant 0 : index
    %c0_18 = arith.constant 0 : index
    %33 = vector.load %arg2[%c0_17, %c0_18] : memref<128x128xf32, #tpu.memory_space<vmem>>, vector<128x128xf32>
    %cst_19 = arith.constant dense<0.000000e+00> : vector<8x128xf32>
    %34 = tpu.matmul %32, %33, %cst_19 {dimension_numbers = #tpu.dot_dimension_numbers<[1], [0], [0], [1], [0, 0, 1, 1], [], []>} : vector<8x128xf32>, vector<128x128xf32>, vector<8x128xf32> -> vector<8x128xf32>
    %cst_20 = arith.constant dense<0.000000e+00> : vector<128xf32>
    %35 = vector.multi_reduction <add>, %34, %cst_20 [0] : vector<8x128xf32> to vector<128xf32>
    %36 = vector.shape_cast %35 : vector<128xf32> to vector<1x128xf32>
    %37 = arith.mulf %34, %34 : vector<8x128xf32>
    %cst_21 = arith.constant dense<0.000000e+00> : vector<128xf32>
    %38 = vector.multi_reduction <add>, %37, %cst_21 [0] : vector<8x128xf32> to vector<128xf32>
    %39 = vector.shape_cast %38 : vector<128xf32> to vector<1x128xf32>
    %cst_22 = arith.constant 1.250000e-01 : f32
    %40 = vector.broadcast %cst_22 : f32 to vector<1x128xf32>
    %41 = arith.mulf %36, %40 : vector<1x128xf32>
    %cst_23 = arith.constant 1.250000e-01 : f32
    %42 = vector.broadcast %cst_23 : f32 to vector<1x128xf32>
    %43 = arith.mulf %39, %42 : vector<1x128xf32>
    %44 = arith.mulf %41, %41 : vector<1x128xf32>
    %45 = arith.subf %43, %44 : vector<1x128xf32>
    %cst_24 = arith.constant 9.99999974E-6 : f32
    %46 = vector.broadcast %cst_24 : f32 to vector<1x128xf32>
    %47 = arith.addf %45, %46 : vector<1x128xf32>
    %48 = math.rsqrt %47 : vector<1x128xf32>
    %49 = arith.mulf %2, %48 : vector<1x128xf32>
    %50 = arith.mulf %41, %49 : vector<1x128xf32>
    %51 = arith.subf %3, %50 : vector<1x128xf32>
    %52 = vector.broadcast %49 : vector<1x128xf32> to vector<8x128xf32>
    %53 = arith.mulf %34, %52 : vector<8x128xf32>
    %54 = vector.broadcast %51 : vector<1x128xf32> to vector<8x128xf32>
    %55 = arith.addf %53, %54 : vector<8x128xf32>
    %cst_25 = arith.constant 0.000000e+00 : f32
    %56 = vector.broadcast %cst_25 : f32 to vector<8x128xf32>
    %57 = arith.maximumf %55, %56 : vector<8x128xf32>
    %c0_26 = arith.constant 0 : index
    %c0_27 = arith.constant 0 : index
    %58 = vector.load %arg3[%c0_26, %c0_27] : memref<128x128xf32, #tpu.memory_space<vmem>>, vector<128x128xf32>
    %cst_28 = arith.constant dense<0.000000e+00> : vector<8x128xf32>
    %59 = tpu.matmul %57, %58, %cst_28 {dimension_numbers = #tpu.dot_dimension_numbers<[1], [0], [0], [1], [0, 0, 1, 1], [], []>} : vector<8x128xf32>, vector<128x128xf32>, vector<8x128xf32> -> vector<8x128xf32>
    %cst_29 = arith.constant dense<0.000000e+00> : vector<128xf32>
    %60 = vector.multi_reduction <add>, %59, %cst_29 [0] : vector<8x128xf32> to vector<128xf32>
    %61 = vector.shape_cast %60 : vector<128xf32> to vector<1x128xf32>
    %62 = arith.mulf %59, %59 : vector<8x128xf32>
    %cst_30 = arith.constant dense<0.000000e+00> : vector<128xf32>
    %63 = vector.multi_reduction <add>, %62, %cst_30 [0] : vector<8x128xf32> to vector<128xf32>
    %64 = vector.shape_cast %63 : vector<128xf32> to vector<1x128xf32>
    %cst_31 = arith.constant 1.250000e-01 : f32
    %65 = vector.broadcast %cst_31 : f32 to vector<1x128xf32>
    %66 = arith.mulf %61, %65 : vector<1x128xf32>
    %cst_32 = arith.constant 1.250000e-01 : f32
    %67 = vector.broadcast %cst_32 : f32 to vector<1x128xf32>
    %68 = arith.mulf %64, %67 : vector<1x128xf32>
    %69 = arith.mulf %66, %66 : vector<1x128xf32>
    %70 = arith.subf %68, %69 : vector<1x128xf32>
    %cst_33 = arith.constant 9.99999974E-6 : f32
    %71 = vector.broadcast %cst_33 : f32 to vector<1x128xf32>
    %72 = arith.addf %70, %71 : vector<1x128xf32>
    %73 = math.rsqrt %72 : vector<1x128xf32>
    %74 = arith.mulf %4, %73 : vector<1x128xf32>
    %75 = arith.mulf %66, %74 : vector<1x128xf32>
    %76 = arith.subf %5, %75 : vector<1x128xf32>
    %77 = vector.broadcast %74 : vector<1x128xf32> to vector<8x128xf32>
    %78 = arith.mulf %59, %77 : vector<8x128xf32>
    %79 = vector.broadcast %76 : vector<1x128xf32> to vector<8x128xf32>
    %80 = arith.addf %78, %79 : vector<8x128xf32>
    %cst_34 = arith.constant 0.000000e+00 : f32
    %81 = vector.broadcast %cst_34 : f32 to vector<8x128xf32>
    %82 = arith.maximumf %80, %81 : vector<8x128xf32>
    %c0_35 = arith.constant 0 : index
    %c0_36 = arith.constant 0 : index
    %83 = vector.load %arg4[%c0_35, %c0_36] : memref<128x128xf32, #tpu.memory_space<vmem>>, vector<128x128xf32>
    %cst_37 = arith.constant dense<0.000000e+00> : vector<8x128xf32>
    %84 = tpu.matmul %82, %83, %cst_37 {dimension_numbers = #tpu.dot_dimension_numbers<[1], [0], [0], [1], [0, 0, 1, 1], [], []>} : vector<8x128xf32>, vector<128x128xf32>, vector<8x128xf32> -> vector<8x128xf32>
    %85 = vector.broadcast %6 : vector<1x128xf32> to vector<8x128xf32>
    %86 = arith.addf %84, %85 : vector<8x128xf32>
    %c0_38 = arith.constant 0 : index
    %c0_39 = arith.constant 0 : index
    %87 = vector.load %arg6[%c0_38, %c0_39] : memref<8x128xf32, #tpu.memory_space<vmem>>, vector<8x128xf32>
    tpu.vector_store %arg6[%c0_38, %c0_39], %86 {strides = array<i32>} : memref<8x128xf32, #tpu.memory_space<vmem>>, vector<8x128xf32>,
    return
  }
}

</mosaic_0001>

<llo_original>
// kernel: tpu_custom_call.1
$region0: #{tpu_custom_call.1}
  #allocation0 [shape = 'u32[]', space=smem, size = 0x4, offset = 0x4, fixed_abs, tag = 'smem constant byte address 0x4 - core index']
  #allocation1 [shape = 'u32[144,128]{1,0:T(1,128)}', space=vmem, size = 0x12000, scoped, tag = 'internal scratch']
  %s0 = inlined_call_operand.hbm [shape: f32[8,128], index: 0, kind: input, shape index: {}]
  %s1 = inlined_call_operand.hbm [shape: f32[128,128], index: 1, kind: input, shape index: {}]
  %s2 = inlined_call_operand.hbm [shape: f32[128,128], index: 2, kind: input, shape index: {}]
  %s3 = inlined_call_operand.hbm [shape: f32[128,128], index: 3, kind: input, shape index: {}]
  %s4 = inlined_call_operand.hbm [shape: f32[128,128], index: 4, kind: input, shape index: {}]
  %s5 = inlined_call_operand.vmem [shape: f32[8,128], index: 5, kind: input, shape index: {}]
  %s6 = inlined_call_operand.hbm [shape: f32[8,128], index: 6, kind: output, shape index: {}]
  %s7 = sld [smem:[#allocation0]]
  $region54: #{tpu_custom_call.1} parent=0
    _
  %s9 = ssub.s32 1, %s7
  %s10 = scalar_select 0, %s9, %s7
  $region1: #{tpu_custom_call.1} parent=0
    #allocation2 [shape = 'u8[4096]{0}', space=vmem, size = 0x1000, scoped, tag = 'input window, operand 0, single buffered']
    #allocation3 [shape = 's32[1]{0}', space=sflag, size = 0x4, scoped, tag = 'scoped memory for tpu_custom_call.1']
    #allocation4 [shape = 's32[1]{0}', space=sflag, size = 0x4, scoped, tag = 'scoped memory for tpu_custom_call.1']
    #allocation5 [shape = 'u8[65536]{0}', space=vmem, size = 0x10000, scoped, tag = 'input window, operand 1, single buffered']
    #allocation6 [shape = 's32[1]{0}', space=sflag, size = 0x4, scoped, tag = 'scoped memory for tpu_custom_call.1']
    #allocation7 [shape = 'u8[65536]{0}', space=vmem, size = 0x10000, scoped, tag = 'input window, operand 2, single buffered']
    #allocation8 [shape = 'u8[65536]{0}', space=vmem, size = 0x10000, scoped, tag = 'input window, operand 3, single buffered']
    #allocation9 [shape = 's32[1]{0}', space=sflag, size = 0x4, scoped, tag = 'scoped memory for tpu_custom_call.1']
    #allocation10 [shape = 'u8[65536]{0}', space=vmem, size = 0x10000, scoped, tag = 'input window, operand 4, single buffered']
    #allocation11 [shape = 'u8[4096]{0}', space=vmem, size = 0x1000, scoped, tag = 'output window, operand 0, single buffered']
    %11 = vsyncpa [#allocation3], 0
    %12 = vsyncpa [#allocation6], 0
    %13 = vsyncpa [#allocation9], 0
    %14 = vsyncpa [#allocation4], 0
    // Predicated region
    $region2: #{tpu_custom_call.1} parent=1 // pred_check
      _
    $region3: #{tpu_custom_call.1} parent=1 // pred_check_branch
      %16 = sbr.rel (0) target = $region5
    $region4: #{tpu_custom_call.1} parent=1 // pred_region
      %s18 = ssub.s32 128, 128
      %19 = vsyncadd [#allocation3], %s18
      %s21 = sshll.u32 [#allocation2], 4
      %s22 = int_to_ptr.vmem [resolvable:$true] %s21
      %24 = dma.hbm_to_vmem [thread:$0]  %s0, 128, %s22, [#allocation3]
    $region5: #{tpu_custom_call.1} parent=1 // pred_fallthru
      _
    // Predicated region
    $region6: #{tpu_custom_call.1} parent=1 // pred_check
      _
    $region7: #{tpu_custom_call.1} parent=1 // pred_check_branch
      %26 = sbr.rel (0) target = $region9
    $region8: #{tpu_custom_call.1} parent=1 // pred_region
      %s28 = ssub.s32 2048, 2048
      %29 = vsyncadd [#allocation6], %s28
      %s30 = sshll.u32 [#allocation5], 4
      %s31 = int_to_ptr.vmem [resolvable:$true] %s30
      %36 = dma.hbm_to_vmem [thread:$0]  %s1, 2048, %s31, [#allocation6], 128, 128, 8
    $region9: #{tpu_custom_call.1} parent=1 // pred_fallthru
      _
    // Predicated region
    $region10: #{tpu_custom_call.1} parent=1 // pred_check
      _
    $region11: #{tpu_custom_call.1} parent=1 // pred_check_branch
      %38 = sbr.rel (0) target = $region13
    $region12: #{tpu_custom_call.1} parent=1 // pred_region
      %s40 = ssub.s32 2048, 2048
      %41 = vsyncadd [#allocation6], %s40
      %s42 = sshll.u32 [#allocation7], 4
      %s43 = int_to_ptr.vmem [resolvable:$true] %s42
      %48 = dma.hbm_to_vmem [thread:$0]  %s2, 2048, %s43, [#allocation6], 128, 128, 8
    $region13: #{tpu_custom_call.1} parent=1 // pred_fallthru
      _
    // Predicated region
    $region14: #{tpu_custom_call.1} parent=1 // pred_check
      _
    $region15: #{tpu_custom_call.1} parent=1 // pred_check_branch
      %50 = sbr.rel (0) target = $region17
    $region16: #{tpu_custom_call.1} parent=1 // pred_region
      %s52 = ssub.s32 2048, 2048
      %53 = vsyncadd [#allocation9], %s52
      %s54 = sshll.u32 [#allocation8], 4
      %s55 = int_to_ptr.vmem [resolvable:$true] %s54
      %60 = dma.hbm_to_vmem [thread:$0]  %s3, 2048, %s55, [#allocation9], 128, 128, 8
    $region17: #{tpu_custom_call.1} parent=1 // pred_fallthru
      _
    // Predicated region
    $region18: #{tpu_custom_call.1} parent=1 // pred_check
      _
    $region19: #{tpu_custom_call.1} parent=1 // pred_check_branch
      %62 = sbr.rel (0) target = $region21
    $region20: #{tpu_custom_call.1} parent=1 // pred_region
      %s64 = ssub.s32 2048, 2048
      %65 = vsyncadd [#allocation9], %s64
      %s66 = sshll.u32 [#allocation10], 4
      %s67 = int_to_ptr.vmem [resolvable:$true] %s66
      %72 = dma.hbm_to_vmem [thread:$0]  %s4, 2048, %s67, [#allocation9], 128, 128, 8
    $region21: #{tpu_custom_call.1} parent=1 // pred_fallthru
      _
    // Predicated region
    $region22: #{tpu_custom_call.1} parent=1 // pred_check
      _
    $region23: #{tpu_custom_call.1} parent=1 // pred_check_branch
      %74 = sbr.rel (0) target = $region25
    $region24: #{tpu_custom_call.1} parent=1 // pred_region
      _
    $region25: #{tpu_custom_call.1} parent=1 // pred_fallthru
      _
    // Predicated region
    $region26: #{tpu_custom_call.1} parent=1 // pred_check
      _
    $region27: #{tpu_custom_call.1} parent=1 // pred_check_branch
      %76 = sbr.rel (0) target = $region29
    $region28: #{tpu_custom_call.1} parent=1 // pred_region
      %77 = dma.done [#allocation3], 128
    $region29: #{tpu_custom_call.1} parent=1 // pred_fallthru
      _
    // Predicated region
    $region30: #{tpu_custom_call.1} parent=1 // pred_check
      _
    $region31: #{tpu_custom_call.1} parent=1 // pred_check_branch
      %79 = sbr.rel (0) target = $region33
    $region32: #{tpu_custom_call.1} parent=1 // pred_region
      %80 = dma.done [#allocation6], 2048
    $region33: #{tpu_custom_call.1} parent=1 // pred_fallthru
      _
    // Predicated region
    $region34: #{tpu_custom_call.1} parent=1 // pred_check
      _
    $region35: #{tpu_custom_call.1} parent=1 // pred_check_branch
      %82 = sbr.rel (0) target = $region37
    $region36: #{tpu_custom_call.1} parent=1 // pred_region
      %83 = dma.done [#allocation6], 2048
    $region37: #{tpu_custom_call.1} parent=1 // pred_fallthru
      _
    // Predicated region
    $region38: #{tpu_custom_call.1} parent=1 // pred_check
      _
    $region39: #{tpu_custom_call.1} parent=1 // pred_check_branch
      %85 = sbr.rel (0) target = $region41
    $region40: #{tpu_custom_call.1} parent=1 // pred_region
      %86 = dma.done [#allocation9], 2048
    $region41: #{tpu_custom_call.1} parent=1 // pred_fallthru
      _
    // Predicated region
    $region42: #{tpu_custom_call.1} parent=1 // pred_check
      _
    $region43: #{tpu_custom_call.1} parent=1 // pred_check_branch
      %88 = sbr.rel (0) target = $region45
    $region44: #{tpu_custom_call.1} parent=1 // pred_region
      %89 = dma.done [#allocation9], 2048
    $region45: #{tpu_custom_call.1} parent=1 // pred_fallthru
      _
    %v90 = vld [vmem:[%s5] sm:$0x1]
    %v91 = vld [vmem:[%s5 + $0x1] sm:$0x1]
    %v92 = vld [vmem:[%s5 + $0x2] sm:$0x1]
    %v93 = vld [vmem:[%s5 + $0x3] sm:$0x1]
    %v94 = vld [vmem:[%s5 + $0x4] sm:$0x1]
    %v95 = vld [vmem:[%s5 + $0x5] sm:$0x1]
    %v96 = vld [vmem:[%s5 + $0x6] sm:$0x1]
    %v97 = vld [vmem:[#allocation2] sm:$0xff]
    %v98 = vld [vmem:[#allocation5] sm:$0xff]
    %v99 = vld [vmem:[#allocation5 + $0x8] sm:$0xff]
    %v100 = vld [vmem:[#allocation5 + $0x10] sm:$0xff]
    %v101 = vld [vmem:[#allocation5 + $0x18] sm:$0xff]
    %v102 = vld [vmem:[#allocation5 + $0x20] sm:$0xff]
    %v103 = vld [vmem:[#allocation5 + $0x28] sm:$0xff]
    %v104 = vld [vmem:[#allocation5 + $0x30] sm:$0xff]
    %v105 = vld [vmem:[#allocation5 + $0x38] sm:$0xff]
    %v106 = vld [vmem:[#allocation5 + $0x40] sm:$0xff]
    %v107 = vld [vmem:[#allocation5 + $0x48] sm:$0xff]
    %v108 = vld [vmem:[#allocation5 + $0x50] sm:$0xff]
    %v109 = vld [vmem:[#allocation5 + $0x58] sm:$0xff]
    %v110 = vld [vmem:[#allocation5 + $0x60] sm:$0xff]
    %v111 = vld [vmem:[#allocation5 + $0x68] sm:$0xff]
    %v112 = vld [vmem:[#allocation5 + $0x70] sm:$0xff]
    %v113 = vld [vmem:[#allocation5 + $0x78] sm:$0xff]
    %114 = vmatprep.subr.mxu0 0.0
    %115 = vmatpush1.msra.mxu0 %v98
    %116 = vmatprep.subr.mxu0 0.0
    %117 = vmatpush1.msra.mxu0 %v99
    %118 = vmatprep.subr.mxu0 0.0
    %119 = vmatpush1.msra.mxu0 %v100
    %120 = vmatprep.subr.mxu0 0.0
    %121 = vmatpush1.msra.mxu0 %v101
    %122 = vmatprep.subr.mxu0 0.0
    %123 = vmatpush1.msra.mxu0 %v102
    %124 = vmatprep.subr.mxu0 0.0
    %125 = vmatpush1.msra.mxu0 %v103
    %126 = vmatprep.subr.mxu0 0.0
    %127 = vmatpush1.msra.mxu0 %v104
    %128 = vmatprep.subr.mxu0 0.0
    %129 = vmatpush1.msra.mxu0 %v105
    %130 = vmatprep.subr.mxu0 0.0
    %131 = vmatpush1.msra.mxu0 %v106
    %132 = vmatprep.subr.mxu0 0.0
    %133 = vmatpush1.msra.mxu0 %v107
    %134 = vmatprep.subr.mxu0 0.0
    %135 = vmatpush1.msra.mxu0 %v108
    %136 = vmatprep.subr.mxu0 0.0
    %137 = vmatpush1.msra.mxu0 %v109
    %138 = vmatprep.subr.mxu0 0.0
    %139 = vmatpush1.msra.mxu0 %v110
    %140 = vmatprep.subr.mxu0 0.0
    %141 = vmatpush1.msra.mxu0 %v111
    %142 = vmatprep.subr.mxu0 0.0
    %143 = vmatpush1.msra.mxu0 %v112
    %144 = vmatprep.subr.mxu0 0.0
    %145 = vmatpush1.msra.mxu0 %v113
    %146 = vmatprep.subr.mxu0 0.0
    %147 = vmatpush1.msra.mxu0 0.0
    %148 = vmatprep.subr.mxu0 0.0
    %149 = vmatpush1.msra.mxu0 0.0
    %150 = vmatprep.subr.mxu0 0.0
    %151 = vmatpush1.msra.mxu0 0.0
    %152 = vmatprep.subr.mxu0 0.0
    %153 = vmatpush1.msra.mxu0 0.0
    %154 = vmatprep.subr.mxu0 0.0
    %155 = vmatpush1.msra.mxu0 0.0
    %156 = vmatprep.subr.mxu0 0.0
    %157 = vmatpush1.msra.mxu0 0.0
    %158 = vmatprep.subr.mxu0 0.0
    %159 = vmatpush1.msra.mxu0 0.0
    %160 = vmatprep.subr.mxu0 0.0
    %161 = vmatpush1.msra.mxu0 0.0
    %162 = vmatprep.subr.mxu0 0.0
    %163 = vmatpush1.msra.mxu0 0.0
    %164 = vmatprep.subr.mxu0 0.0
    %165 = vmatpush1.msra.mxu0 0.0
    %166 = vmatprep.subr.mxu0 0.0
    %167 = vmatpush1.msra.mxu0 0.0
    %168 = vmatprep.subr.mxu0 0.0
    %169 = vmatpush1.msra.mxu0 0.0
    %170 = vmatprep.subr.mxu0 0.0
    %171 = vmatpush1.msra.mxu0 0.0
    %172 = vmatprep.subr.mxu0 0.0
    %173 = vmatpush1.msra.mxu0 0.0
    %174 = vmatprep.subr.mxu0 0.0
    %175 = vmatpush1.msra.mxu0 0.0
    %176 = vmatprep.subr.mxu0 0.0
    %177 = vmatpush1.msra.mxu0 0.0
    %178 = vmatprep.mubr.f32.mxu0 0.0
    %179 = vmatmul.mubr.f32.gmra.mrb[0].mxu0 %v97
    %v180 = vpop.f32.mrb[0].mxu0
    %v181 = vadd.f32 0.0, %v180
    %v182 = vpop.f32.mrb[0].mxu0
    %183 = vdwg.mxu0
    %v184 = vrot.slane %v181, 4
    %v185 = vadd.f32 %v181, %v184
    %v186 = vrot.slane %v185, 2
    %v187 = vadd.f32 %v185, %v186
    %v188 = vrot.slane %v187, 1
    %v189 = vadd.f32 %v187, %v188
    %v190 = vmul.f32 %v181, %v181
    %v191 = vrot.slane %v190, 4
    %v192 = vadd.f32 %v190, %v191
    %v193 = vrot.slane %v192, 2
    %v194 = vadd.f32 %v192, %v193
    %v195 = vrot.slane %v194, 1
    %v196 = vadd.f32 %v194, %v195
    %v197 = vmul.f32 %v189, 0.125
    %v198 = vmul.f32 %v196, 0.125
    %v199 = vmul.f32 %v197, %v197
    %v200 = vsub.f32 %v198, %v199
    %v201 = vadd.f32 %v200, 1e-05
    %v202 = vrsqrt.pop %v201
    %v203 = vmul.f32 %v90, %v202
    %v204 = vmul.f32 %v197, %v203
    %v205 = vsub.f32 %v91, %v204
    %v206 = vlaneseq
    %v207 = vshrl.u32 %v206, 7
    %v208 = vsub.s32 0, %v207
    %v209 = vrot.slane %v203, %v208
    %v210 = vmul.f32 %v181, %v209
    %v211 = vlaneseq
    %v212 = vshrl.u32 %v211, 7
    %v213 = vsub.s32 0, %v212
    %v214 = vrot.slane %v205, %v213
    %v215 = vadd.f32 %v210, %v214
    %v216 = vmax.f32 %v215, 0.0
    %v217 = vld [vmem:[#allocation7] sm:$0xff]
    %v218 = vld [vmem:[#allocation7 + $0x8] sm:$0xff]
    %v219 = vld [vmem:[#allocation7 + $0x10] sm:$0xff]
    %v220 = vld [vmem:[#allocation7 + $0x18] sm:$0xff]
    %v221 = vld [vmem:[#allocation7 + $0x20] sm:$0xff]
    %v222 = vld [vmem:[#allocation7 + $0x28] sm:$0xff]
    %v223 = vld [vmem:[#allocation7 + $0x30] sm:$0xff]
    %v224 = vld [vmem:[#allocation7 + $0x38] sm:$0xff]
    %v225 = vld [vmem:[#allocation7 + $0x40] sm:$0xff]
    %v226 = vld [vmem:[#allocation7 + $0x48] sm:$0xff]
    %v227 = vld [vmem:[#allocation7 + $0x50] sm:$0xff]
    %v228 = vld [vmem:[#allocation7 + $0x58] sm:$0xff]
    %v229 = vld [vmem:[#allocation7 + $0x60] sm:$0xff]
    %v230 = vld [vmem:[#allocation7 + $0x68] sm:$0xff]
    %v231 = vld [vmem:[#allocation7 + $0x70] sm:$0xff]
    %v232 = vld [vmem:[#allocation7 + $0x78] sm:$0xff]
    %233 = vmatprep.subr.mxu0 0.0
    %234 = vmatpush1.msra.mxu0 %v217
    %235 = vmatprep.subr.mxu0 0.0
    %236 = vmatpush1.msra.mxu0 %v218
    %237 = vmatprep.subr.mxu0 0.0
    %238 = vmatpush1.msra.mxu0 %v219
    %239 = vmatprep.subr.mxu0 0.0
    %240 = vmatpush1.msra.mxu0 %v220
    %241 = vmatprep.subr.mxu0 0.0
    %242 = vmatpush1.msra.mxu0 %v221
    %243 = vmatprep.subr.mxu0 0.0
    %244 = vmatpush1.msra.mxu0 %v222
    %245 = vmatprep.subr.mxu0 0.0
    %246 = vmatpush1.msra.mxu0 %v223
    %247 = vmatprep.subr.mxu0 0.0
    %248 = vmatpush1.msra.mxu0 %v224
    %249 = vmatprep.subr.mxu0 0.0
    %250 = vmatpush1.msra.mxu0 %v225
    %251 = vmatprep.subr.mxu0 0.0
    %252 = vmatpush1.msra.mxu0 %v226
    %253 = vmatprep.subr.mxu0 0.0
    %254 = vmatpush1.msra.mxu0 %v227
    %255 = vmatprep.subr.mxu0 0.0
    %256 = vmatpush1.msra.mxu0 %v228
    %257 = vmatprep.subr.mxu0 0.0
    %258 = vmatpush1.msra.mxu0 %v229
    %259 = vmatprep.subr.mxu0 0.0
    %260 = vmatpush1.msra.mxu0 %v230
    %261 = vmatprep.subr.mxu0 0.0
    %262 = vmatpush1.msra.mxu0 %v231
    %263 = vmatprep.subr.mxu0 0.0
    %264 = vmatpush1.msra.mxu0 %v232
    %265 = vmatprep.subr.mxu0 0.0
    %266 = vmatpush1.msra.mxu0 0.0
    %267 = vmatprep.subr.mxu0 0.0
    %268 = vmatpush1.msra.mxu0 0.0
    %269 = vmatprep.subr.mxu0 0.0
    %270 = vmatpush1.msra.mxu0 0.0
    %271 = vmatprep.subr.mxu0 0.0
    %272 = vmatpush1.msra.mxu0 0.0
    %273 = vmatprep.subr.mxu0 0.0
    %274 = vmatpush1.msra.mxu0 0.0
    %275 = vmatprep.subr.mxu0 0.0
    %276 = vmatpush1.msra.mxu0 0.0
    %277 = vmatprep.subr.mxu0 0.0
    %278 = vmatpush1.msra.mxu0 0.0
    %279 = vmatprep.subr.mxu0 0.0
    %280 = vmatpush1.msra.mxu0 0.0
    %281 = vmatprep.subr.mxu0 0.0
    %282 = vmatpush1.msra.mxu0 0.0
    %283 = vmatprep.subr.mxu0 0.0
    %284 = vmatpush1.msra.mxu0 0.0
    %285 = vmatprep.subr.mxu0 0.0
    %286 = vmatpush1.msra.mxu0 0.0
    %287 = vmatprep.subr.mxu0 0.0
    %288 = vmatpush1.msra.mxu0 0.0
    %289 = vmatprep.subr.mxu0 0.0
    %290 = vmatpush1.msra.mxu0 0.0
    %291 = vmatprep.subr.mxu0 0.0
    %292 = vmatpush1.msra.mxu0 0.0
    %293 = vmatprep.subr.mxu0 0.0
    %294 = vmatpush1.msra.mxu0 0.0
    %295 = vmatprep.subr.mxu0 0.0
    %296 = vmatpush1.msra.mxu0 0.0
    %297 = vmatprep.mubr.f32.mxu0 0.0
    %298 = vmatmul.mubr.f32.gmra.mrb[0].mxu0 %v216
    %v299 = vpop.f32.mrb[0].mxu0
    %v300 = vadd.f32 0.0, %v299
    %v301 = vpop.f32.mrb[0].mxu0
    %302 = vdwg.mxu0
    %v303 = vrot.slane %v300, 4
    %v304 = vadd.f32 %v300, %v303
    %v305 = vrot.slane %v304, 2
    %v306 = vadd.f32 %v304, %v305
    %v307 = vrot.slane %v306, 1
    %v308 = vadd.f32 %v306, %v307
    %v309 = vmul.f32 %v300, %v300
    %v310 = vrot.slane %v309, 4
    %v311 = vadd.f32 %v309, %v310
    %v312 = vrot.slane %v311, 2
    %v313 = vadd.f32 %v311, %v312
    %v314 = vrot.slane %v313, 1
    %v315 = vadd.f32 %v313, %v314
    %v316 = vmul.f32 %v308, 0.125
    %v317 = vmul.f32 %v315, 0.125
    %v318 = vmul.f32 %v316, %v316
    %v319 = vsub.f32 %v317, %v318
    %v320 = vadd.f32 %v319, 1e-05
    %v321 = vrsqrt.pop %v320
    %v322 = vmul.f32 %v92, %v321
    %v323 = vmul.f32 %v316, %v322
    %v324 = vsub.f32 %v93, %v323
    %v325 = vlaneseq
    %v326 = vshrl.u32 %v325, 7
    %v327 = vsub.s32 0, %v326
    %v328 = vrot.slane %v322, %v327
    %v329 = vmul.f32 %v300, %v328
    %v330 = vlaneseq
    %v331 = vshrl.u32 %v330, 7
    %v332 = vsub.s32 0, %v331
    %v333 = vrot.slane %v324, %v332
    %v334 = vadd.f32 %v329, %v333
    %v335 = vmax.f32 %v334, 0.0
    %v336 = vld [vmem:[#allocation8] sm:$0xff]
    %v337 = vld [vmem:[#allocation8 + $0x8] sm:$0xff]
    %v338 = vld [vmem:[#allocation8 + $0x10] sm:$0xff]
    %v339 = vld [vmem:[#allocation8 + $0x18] sm:$0xff]
    %v340 = vld [vmem:[#allocation8 + $0x20] sm:$0xff]
    %v341 = vld [vmem:[#allocation8 + $0x28] sm:$0xff]
    %v342 = vld [vmem:[#allocation8 + $0x30] sm:$0xff]
    %v343 = vld [vmem:[#allocation8 + $0x38] sm:$0xff]
    %v344 = vld [vmem:[#allocation8 + $0x40] sm:$0xff]
    %v345 = vld [vmem:[#allocation8 + $0x48] sm:$0xff]
    %v346 = vld [vmem:[#allocation8 + $0x50] sm:$0xff]
    %v347 = vld [vmem:[#allocation8 + $0x58] sm:$0xff]
    %v348 = vld [vmem:[#allocation8 + $0x60] sm:$0xff]
    %v349 = vld [vmem:[#allocation8 + $0x68] sm:$0xff]
    %v350 = vld [vmem:[#allocation8 + $0x70] sm:$0xff]
    %v351 = vld [vmem:[#allocation8 + $0x78] sm:$0xff]
    %352 = vmatprep.subr.mxu0 0.0
    %353 = vmatpush1.msra.mxu0 %v336
    %354 = vmatprep.subr.mxu0 0.0
    %355 = vmatpush1.msra.mxu0 %v337
    %356 = vmatprep.subr.mxu0 0.0
    %357 = vmatpush1.msra.mxu0 %v338
    %358 = vmatprep.subr.mxu0 0.0
    %359 = vmatpush1.msra.mxu0 %v339
    %360 = vmatprep.subr.mxu0 0.0
    %361 = vmatpush1.msra.mxu0 %v340
    %362 = vmatprep.subr.mxu0 0.0
    %363 = vmatpush1.msra.mxu0 %v341
    %364 = vmatprep.subr.mxu0 0.0
    %365 = vmatpush1.msra.mxu0 %v342
    %366 = vmatprep.subr.mxu0 0.0
    %367 = vmatpush1.msra.mxu0 %v343
    %368 = vmatprep.subr.mxu0 0.0
    %369 = vmatpush1.msra.mxu0 %v344
    %370 = vmatprep.subr.mxu0 0.0
    %371 = vmatpush1.msra.mxu0 %v345
    %372 = vmatprep.subr.mxu0 0.0
    %373 = vmatpush1.msra.mxu0 %v346
    %374 = vmatprep.subr.mxu0 0.0
    %375 = vmatpush1.msra.mxu0 %v347
    %376 = vmatprep.subr.mxu0 0.0
    %377 = vmatpush1.msra.mxu0 %v348
    %378 = vmatprep.subr.mxu0 0.0
    %379 = vmatpush1.msra.mxu0 %v349
    %380 = vmatprep.subr.mxu0 0.0
    %381 = vmatpush1.msra.mxu0 %v350
    %382 = vmatprep.subr.mxu0 0.0
    %383 = vmatpush1.msra.mxu0 %v351
    %384 = vmatprep.subr.mxu0 0.0
    %385 = vmatpush1.msra.mxu0 0.0
    %386 = vmatprep.subr.mxu0 0.0
    %387 = vmatpush1.msra.mxu0 0.0
    %388 = vmatprep.subr.mxu0 0.0
    %389 = vmatpush1.msra.mxu0 0.0
    %390 = vmatprep.subr.mxu0 0.0
    %391 = vmatpush1.msra.mxu0 0.0
    %392 = vmatprep.subr.mxu0 0.0
    %393 = vmatpush1.msra.mxu0 0.0
    %394 = vmatprep.subr.mxu0 0.0
    %395 = vmatpush1.msra.mxu0 0.0
    %396 = vmatprep.subr.mxu0 0.0
    %397 = vmatpush1.msra.mxu0 0.0
    %398 = vmatprep.subr.mxu0 0.0
    %399 = vmatpush1.msra.mxu0 0.0
    %400 = vmatprep.subr.mxu0 0.0
    %401 = vmatpush1.msra.mxu0 0.0
    %402 = vmatprep.subr.mxu0 0.0
    %403 = vmatpush1.msra.mxu0 0.0
    %404 = vmatprep.subr.mxu0 0.0
    %405 = vmatpush1.msra.mxu0 0.0
    %406 = vmatprep.subr.mxu0 0.0
    %407 = vmatpush1.msra.mxu0 0.0
    %408 = vmatprep.subr.mxu0 0.0
    %409 = vmatpush1.msra.mxu0 0.0
    %410 = vmatprep.subr.mxu0 0.0
    %411 = vmatpush1.msra.mxu0 0.0
    %412 = vmatprep.subr.mxu0 0.0
    %413 = vmatpush1.msra.mxu0 0.0
    %414 = vmatprep.subr.mxu0 0.0
    %415 = vmatpush1.msra.mxu0 0.0
    %416 = vmatprep.mubr.f32.mxu0 0.0
    %417 = vmatmul.mubr.f32.gmra.mrb[0].mxu0 %v335
    %v418 = vpop.f32.mrb[0].mxu0
    %v419 = vadd.f32 0.0, %v418
    %v420 = vpop.f32.mrb[0].mxu0
    %421 = vdwg.mxu0
    %v422 = vrot.slane %v419, 4
    %v423 = vadd.f32 %v419, %v422
    %v424 = vrot.slane %v423, 2
    %v425 = vadd.f32 %v423, %v424
    %v426 = vrot.slane %v425, 1
    %v427 = vadd.f32 %v425, %v426
    %v428 = vmul.f32 %v419, %v419
    %v429 = vrot.slane %v428, 4
    %v430 = vadd.f32 %v428, %v429
    %v431 = vrot.slane %v430, 2
    %v432 = vadd.f32 %v430, %v431
    %v433 = vrot.slane %v432, 1
    %v434 = vadd.f32 %v432, %v433
    %v435 = vmul.f32 %v427, 0.125
    %v436 = vmul.f32 %v434, 0.125
    %v437 = vmul.f32 %v435, %v435
    %v438 = vsub.f32 %v436, %v437
    %v439 = vadd.f32 %v438, 1e-05
    %v440 = vrsqrt.pop %v439
    %v441 = vmul.f32 %v94, %v440
    %v442 = vmul.f32 %v435, %v441
    %v443 = vsub.f32 %v95, %v442
    %v444 = vlaneseq
    %v445 = vshrl.u32 %v444, 7
    %v446 = vsub.s32 0, %v445
    %v447 = vrot.slane %v441, %v446
    %v448 = vmul.f32 %v419, %v447
    %v449 = vlaneseq
    %v450 = vshrl.u32 %v449, 7
    %v451 = vsub.s32 0, %v450
    %v452 = vrot.slane %v443, %v451
    %v453 = vadd.f32 %v448, %v452
    %v454 = vmax.f32 %v453, 0.0
    %v455 = vld [vmem:[#allocation10] sm:$0xff]
    %v456 = vld [vmem:[#allocation10 + $0x8] sm:$0xff]
    %v457 = vld [vmem:[#allocation10 + $0x10] sm:$0xff]
    %v458 = vld [vmem:[#allocation10 + $0x18] sm:$0xff]
    %v459 = vld [vmem:[#allocation10 + $0x20] sm:$0xff]
    %v460 = vld [vmem:[#allocation10 + $0x28] sm:$0xff]
    %v461 = vld [vmem:[#allocation10 + $0x30] sm:$0xff]
    %v462 = vld [vmem:[#allocation10 + $0x38] sm:$0xff]
    %v463 = vld [vmem:[#allocation10 + $0x40] sm:$0xff]
    %v464 = vld [vmem:[#allocation10 + $0x48] sm:$0xff]
    %v465 = vld [vmem:[#allocation10 + $0x50] sm:$0xff]
    %v466 = vld [vmem:[#allocation10 + $0x58] sm:$0xff]
    %v467 = vld [vmem:[#allocation10 + $0x60] sm:$0xff]
    %v468 = vld [vmem:[#allocation10 + $0x68] sm:$0xff]
    %v469 = vld [vmem:[#allocation10 + $0x70] sm:$0xff]
    %v470 = vld [vmem:[#allocation10 + $0x78] sm:$0xff]
    %v471 = vlaneseq
    %v472 = vshrl.u32 %v471, 7
    %v473 = vsub.s32 0, %v472
    %v474 = vrot.slane %v96, %v473
    %475 = vmatprep.subr.mxu0 0.0
    %476 = vmatpush1.msra.mxu0 %v455
    %477 = vmatprep.subr.mxu0 0.0
    %478 = vmatpush1.msra.mxu0 %v456
    %479 = vmatprep.subr.mxu0 0.0
    %480 = vmatpush1.msra.mxu0 %v457
    %481 = vmatprep.subr.mxu0 0.0
    %482 = vmatpush1.msra.mxu0 %v458
    %483 = vmatprep.subr.mxu0 0.0
    %484 = vmatpush1.msra.mxu0 %v459
    %485 = vmatprep.subr.mxu0 0.0
    %486 = vmatpush1.msra.mxu0 %v460
    %487 = vmatprep.subr.mxu0 0.0
    %488 = vmatpush1.msra.mxu0 %v461
    %489 = vmatprep.subr.mxu0 0.0
    %490 = vmatpush1.msra.mxu0 %v462
    %491 = vmatprep.subr.mxu0 0.0
    %492 = vmatpush1.msra.mxu0 %v463
    %493 = vmatprep.subr.mxu0 0.0
    %494 = vmatpush1.msra.mxu0 %v464
    %495 = vmatprep.subr.mxu0 0.0
    %496 = vmatpush1.msra.mxu0 %v465
    %497 = vmatprep.subr.mxu0 0.0
    %498 = vmatpush1.msra.mxu0 %v466
    %499 = vmatprep.subr.mxu0 0.0
    %500 = vmatpush1.msra.mxu0 %v467
    %501 = vmatprep.subr.mxu0 0.0
    %502 = vmatpush1.msra.mxu0 %v468
    %503 = vmatprep.subr.mxu0 0.0
    %504 = vmatpush1.msra.mxu0 %v469
    %505 = vmatprep.subr.mxu0 0.0
    %506 = vmatpush1.msra.mxu0 %v470
    %507 = vmatprep.subr.mxu0 0.0
    %508 = vmatpush1.msra.mxu0 0.0
    %509 = vmatprep.subr.mxu0 0.0
    %510 = vmatpush1.msra.mxu0 0.0
    %511 = vmatprep.subr.mxu0 0.0
    %512 = vmatpush1.msra.mxu0 0.0
    %513 = vmatprep.subr.mxu0 0.0
    %514 = vmatpush1.msra.mxu0 0.0
    %515 = vmatprep.subr.mxu0 0.0
    %516 = vmatpush1.msra.mxu0 0.0
    %517 = vmatprep.subr.mxu0 0.0
    %518 = vmatpush1.msra.mxu0 0.0
    %519 = vmatprep.subr.mxu0 0.0
    %520 = vmatpush1.msra.mxu0 0.0
    %521 = vmatprep.subr.mxu0 0.0
    %522 = vmatpush1.msra.mxu0 0.0
    %523 = vmatprep.subr.mxu0 0.0
    %524 = vmatpush1.msra.mxu0 0.0
    %525 = vmatprep.subr.mxu0 0.0
    %526 = vmatpush1.msra.mxu0 0.0
    %527 = vmatprep.subr.mxu0 0.0
    %528 = vmatpush1.msra.mxu0 0.0
    %529 = vmatprep.subr.mxu0 0.0
    %530 = vmatpush1.msra.mxu0 0.0
    %531 = vmatprep.subr.mxu0 0.0
    %532 = vmatpush1.msra.mxu0 0.0
    %533 = vmatprep.subr.mxu0 0.0
    %534 = vmatpush1.msra.mxu0 0.0
    %535 = vmatprep.subr.mxu0 0.0
    %536 = vmatpush1.msra.mxu0 0.0
    %537 = vmatprep.subr.mxu0 0.0
    %538 = vmatpush1.msra.mxu0 0.0
    %539 = vmatprep.mubr.f32.mxu0 0.0
    %540 = vmatmul.mubr.f32.gmra.mrb[0].mxu0 %v454
    %v541 = vpop.f32.mrb[0].mxu0
    %v542 = vadd.f32 %v474, %v541
    %v543 = vpop.f32.mrb[0].mxu0
    %544 = vdwg.mxu0
    %545 = vst [vmem:[#allocation11] sm:$0xff] %v542
    // Predicated region
    $region46: #{tpu_custom_call.1} parent=1 // pred_check
      _
    $region47: #{tpu_custom_call.1} parent=1 // pred_check_branch
      %547 = sbr.rel (0) target = $region49
    $region48: #{tpu_custom_call.1} parent=1 // pred_region
      %s549 = ssub.s32 128, 128
      %550 = vsyncadd [#allocation4], %s549
      %s552 = sshll.u32 [#allocation11], 4
      %s553 = int_to_ptr.vmem [resolvable:$true] %s552
      %555 = dma.vmem_to_hbm [thread:$0]  %s553, 128, %s6, [#allocation4]
    $region49: #{tpu_custom_call.1} parent=1 // pred_fallthru
      _
    // Predicated region
    $region50: #{tpu_custom_call.1} parent=1 // pred_check
      _
    $region51: #{tpu_custom_call.1} parent=1 // pred_check_branch
      %557 = sbr.rel (0) target = $region53
    $region52: #{tpu_custom_call.1} parent=1 // pred_region
      %558 = dma.done [#allocation4], 128
    $region53: #{tpu_custom_call.1} parent=1 // pred_fallthru
      _
    %559 = vsyncpa [#allocation3], 1
    %560 = vsyncpa [#allocation6], 1
    %561 = vsyncpa [#allocation9], 1
    %562 = vsyncpa [#allocation4], 1

</llo_original>
